<compile_context>
chip_gen: v7x
topology: tpu7x:2x2x1
jax: 0.10.0
libtpu: 0.0.40
codegen_flags: <defaults>
</compile_context>

<pallas_src>
import math

import jax
import jax.numpy as jnp
from jax.experimental import pallas as pl
from jax.experimental.pallas import tpu as pltpu


_PAD = 8  # sublane alignment for the packed parameter buffer


def _time_embedding_kernel(t_ref, table_ref, p_ref, out_ref, emb_scr, sem):
    # t_ref:     SMEM (B,) int32                    timesteps
    # table_ref: HBM  (T, d_model) f32              sinusoidal table (pl.ANY)
    # p_ref:     VMEM (d_model+8+dim+8, dim) f32    packed [W1; b1; W2; b2]
    # out_ref:   VMEM (B, dim) f32
    # emb_scr:   VMEM (B, d_model) f32 scratch      gathered embedding rows
    # sem:       DMA semaphores (B,)
    B, d_model = emb_scr.shape
    dim = out_ref.shape[1]

    # In-kernel DMA gather of the B embedding rows (HBM -> VMEM scratch).
    copies = []
    for i in range(B):  # B is small and static -> fully unrolled
        cp = pltpu.make_async_copy(
            table_ref.at[t_ref[i]], emb_scr.at[i], sem.at[i])
        cp.start()
        copies.append(cp)
    for cp in copies:
        cp.wait()

    # Static, 8-row-aligned slices of the single packed parameter buffer.
    w1 = p_ref[0:d_model, :]                          # (d_model, dim)
    b1 = p_ref[d_model:d_model + 1, :]                # (1, dim)
    w2_row = d_model + _PAD
    w2 = p_ref[w2_row:w2_row + dim, :]                # (dim, dim)
    b2 = p_ref[w2_row + dim:w2_row + dim + 1, :]      # (1, dim)

    emb = emb_scr[...]                                # (B, d_model)
    h = jnp.dot(emb, w1, preferred_element_type=jnp.float32) + b1
    h = h * jax.nn.sigmoid(h)                         # Swish
    out = jnp.dot(h, w2, preferred_element_type=jnp.float32) + b2
    out_ref[...] = out.astype(out_ref.dtype)


def make_sinusoidal_table(T: int, d_model: int) -> jnp.ndarray:
    """Exactly mirrors the PyTorch table construction."""
    assert d_model % 2 == 0
    emb = jnp.arange(0, d_model, 2, dtype=jnp.float32) / d_model * math.log(10000.0)
    emb = jnp.exp(-emb)                                     # (d_model//2,)
    pos = jnp.arange(T, dtype=jnp.float32)                  # (T,)
    emb = pos[:, None] * emb[None, :]                       # (T, d_model//2)
    emb = jnp.stack([jnp.sin(emb), jnp.cos(emb)], axis=-1)  # (T, d_model//2, 2)
    return emb.reshape(T, d_model)                          # (T, d_model)


def xavier_uniform(key, fan_in: int, fan_out: int) -> jnp.ndarray:
    bound = math.sqrt(6.0 / (fan_in + fan_out))
    # stored as (in, out) so the kernel computes x @ W
    return jax.random.uniform(key, (fan_in, fan_out), jnp.float32, -bound, bound)


def pack_params(w1, b1, w2, b2):
    """Pack all Linear params into one contiguous (d_model+8+dim+8, dim) buffer.

    Bias rows are padded to 8 rows so every slice start is sublane-aligned.
    """
    d_model, dim = w1.shape
    assert d_model % _PAD == 0 and dim % _PAD == 0
    b1_blk = jnp.zeros((_PAD, dim), jnp.float32).at[0].set(b1)
    b2_blk = jnp.zeros((_PAD, dim), jnp.float32).at[0].set(b2)
    return jnp.concatenate([w1, b1_blk, w2, b2_blk], axis=0)


def init_time_embedding_params(key, T: int, d_model: int, dim: int):
    k1, k2 = jax.random.split(key)
    table = make_sinusoidal_table(T, d_model)
    w1 = xavier_uniform(k1, d_model, dim)
    b1 = jnp.zeros((dim,), jnp.float32)
    w2 = xavier_uniform(k2, dim, dim)
    b2 = jnp.zeros((dim,), jnp.float32)
    packed = pack_params(w1, b1, w2, b2)
    return dict(table=table, w1=w1, b1=b1, w2=w2, b2=b2, packed=packed)


@jax.jit
def time_embedding_forward(params, t):
    """t: int32 array of shape (B,) of timesteps. Returns (B, dim) float32."""
    table = params["table"]      # (T, d_model) f32, stays in HBM
    packed = params["packed"]    # (d_model+8+dim+8, dim) f32, one DMA
    B = t.shape[0]
    d_model = table.shape[1]
    dim = packed.shape[1]

    # Total VMEM footprint: packed params (28 KB) + emb scratch (1 KB) +
    # out (2 KB) — far below any generation's scoped VMEM limit, so no tiling.
    out = pl.pallas_call(
        _time_embedding_kernel,
        out_shape=jax.ShapeDtypeStruct((B, dim), jnp.float32),
        in_specs=[
            pl.BlockSpec(memory_space=pltpu.MemorySpace.SMEM),   # t (B,) int32
            pl.BlockSpec(memory_space=pl.ANY),                   # table in HBM
            pl.BlockSpec(memory_space=pltpu.MemorySpace.VMEM),   # packed params
        ],
        out_specs=pl.BlockSpec(memory_space=pltpu.MemorySpace.VMEM),
        scratch_shapes=[
            pltpu.VMEM((B, d_model), jnp.float32),   # gathered embedding rows
            pltpu.SemaphoreType.DMA((B,)),           # one sem per gathered row
        ],
    )(t, table, packed)
    return out


def _reference_forward(params, t):
    """Pure-JAX reference for correctness check (mirrors PyTorch forward)."""
    emb = jnp.take(params["table"], t, axis=0)
    h = emb @ params["w1"] + params["b1"]
    h = h * jax.nn.sigmoid(h)
    return h @ params["w2"] + params["b2"]


if __name__ == "__main__":
    T, d_model, dim = 1000, 32, 64
    B = 8

    key = jax.random.PRNGKey(0)
    k_params, k_t = jax.random.split(key)

    params = init_time_embedding_params(k_params, T, d_model, dim)
    t = jax.random.randint(k_t, (B,), 0, T, dtype=jnp.int32)

    out = time_embedding_forward(params, t)
    out = jax.block_until_ready(out)

    ref = _reference_forward(params, t)
    assert out.shape == (B, dim), out.shape
    assert jnp.allclose(out, ref, atol=1e-5, rtol=1e-5), (
        float(jnp.max(jnp.abs(out - ref))))

    print("KERNEL_OK")
</pallas_src>

<mosaic_0001>
module attributes {stable_mosaic.version = 11 : i64} {
  func.func @_time_embedding_kernel(%arg0: memref<8xi32, #tpu.memory_space<smem>>, %arg1: memref<1000x32xf32, #tpu.memory_space<any>>, %arg2: memref<112x64xf32, #tpu.memory_space<vmem>>, %arg3: memref<8x64xf32, #tpu.memory_space<vmem>>, %arg4: memref<8x32xf32, #tpu.memory_space<vmem>>, %arg5: memref<8x!tpu.dma_semaphore, #tpu.memory_space<semaphore_mem>>) attributes {dimension_semantics = [], scalar_prefetch = 0 : i64, scratch_operands = 2 : i64, tpu.core_type = #tpu.core_type<tc>} {
    %c0 = arith.constant 0 : index
    %0 = memref.load %arg0[%c0] : memref<8xi32, #tpu.memory_space<smem>>
    %c0_i32 = arith.constant 0 : i32
    %c0_i32_0 = arith.constant 0 : i32
    %c0_i32_1 = arith.constant 0 : i32
    %1 = tpu.memref_slice %arg1[%0, %c0_i32_1] : memref<1000x32xf32, #tpu.memory_space<any>> -> memref<1x32xf32, #tpu.memory_space<any>>
    %2 = tpu.memref_squeeze %1 : memref<1x32xf32, #tpu.memory_space<any>> -> memref<32xf32, #tpu.memory_space<any>>
    %c0_i32_2 = arith.constant 0 : i32
    %3 = tpu.memref_slice %arg4[%c0_i32, %c0_i32_2] : memref<8x32xf32, #tpu.memory_space<vmem>> -> memref<1x32xf32, #tpu.memory_space<vmem>>
    %4 = tpu.memref_squeeze %3 : memref<1x32xf32, #tpu.memory_space<vmem>> -> memref<32xf32, #tpu.memory_space<vmem>>
    %5 = tpu.memref_slice %arg5[%c0_i32_0] : memref<8x!tpu.dma_semaphore, #tpu.memory_space<semaphore_mem>> -> memref<1x!tpu.dma_semaphore, #tpu.memory_space<semaphore_mem>>
    %6 = tpu.memref_squeeze %5 : memref<1x!tpu.dma_semaphore, #tpu.memory_space<semaphore_mem>> -> memref<!tpu.dma_semaphore, #tpu.memory_space<semaphore_mem>>
    tpu.enqueue_dma source(%2 : memref<32xf32, #tpu.memory_space<any>>) target(%4 : memref<32xf32, #tpu.memory_space<vmem>>) target_semaphore(%6 : memref<!tpu.dma_semaphore, #tpu.memory_space<semaphore_mem>>)
    %c1 = arith.constant 1 : index
    %7 = memref.load %arg0[%c1] : memref<8xi32, #tpu.memory_space<smem>>
    %c1_i32 = arith.constant 1 : i32
    %c1_i32_3 = arith.constant 1 : i32
    %c0_i32_4 = arith.constant 0 : i32
    %8 = tpu.memref_slice %arg1[%7, %c0_i32_4] : memref<1000x32xf32, #tpu.memory_space<any>> -> memref<1x32xf32, #tpu.memory_space<any>>
    %9 = tpu.memref_squeeze %8 : memref<1x32xf32, #tpu.memory_space<any>> -> memref<32xf32, #tpu.memory_space<any>>
    %c0_i32_5 = arith.constant 0 : i32
    %10 = tpu.memref_slice %arg4[%c1_i32, %c0_i32_5] : memref<8x32xf32, #tpu.memory_space<vmem>> -> memref<1x32xf32, #tpu.memory_space<vmem>>
    %11 = tpu.memref_squeeze %10 : memref<1x32xf32, #tpu.memory_space<vmem>> -> memref<32xf32, #tpu.memory_space<vmem>>
    %12 = tpu.memref_slice %arg5[%c1_i32_3] : memref<8x!tpu.dma_semaphore, #tpu.memory_space<semaphore_mem>> -> memref<1x!tpu.dma_semaphore, #tpu.memory_space<semaphore_mem>>
    %13 = tpu.memref_squeeze %12 : memref<1x!tpu.dma_semaphore, #tpu.memory_space<semaphore_mem>> -> memref<!tpu.dma_semaphore, #tpu.memory_space<semaphore_mem>>
    tpu.enqueue_dma source(%9 : memref<32xf32, #tpu.memory_space<any>>) target(%11 : memref<32xf32, #tpu.memory_space<vmem>>) target_semaphore(%13 : memref<!tpu.dma_semaphore, #tpu.memory_space<semaphore_mem>>)
    %c2 = arith.constant 2 : index
    %14 = memref.load %arg0[%c2] : memref<8xi32, #tpu.memory_space<smem>>
    %c2_i32 = arith.constant 2 : i32
    %c2_i32_6 = arith.constant 2 : i32
    %c0_i32_7 = arith.constant 0 : i32
    %15 = tpu.memref_slice %arg1[%14, %c0_i32_7] : memref<1000x32xf32, #tpu.memory_space<any>> -> memref<1x32xf32, #tpu.memory_space<any>>
    %16 = tpu.memref_squeeze %15 : memref<1x32xf32, #tpu.memory_space<any>> -> memref<32xf32, #tpu.memory_space<any>>
    %c0_i32_8 = arith.constant 0 : i32
    %17 = tpu.memref_slice %arg4[%c2_i32, %c0_i32_8] : memref<8x32xf32, #tpu.memory_space<vmem>> -> memref<1x32xf32, #tpu.memory_space<vmem>>
    %18 = tpu.memref_squeeze %17 : memref<1x32xf32, #tpu.memory_space<vmem>> -> memref<32xf32, #tpu.memory_space<vmem>>
    %19 = tpu.memref_slice %arg5[%c2_i32_6] : memref<8x!tpu.dma_semaphore, #tpu.memory_space<semaphore_mem>> -> memref<1x!tpu.dma_semaphore, #tpu.memory_space<semaphore_mem>>
    %20 = tpu.memref_squeeze %19 : memref<1x!tpu.dma_semaphore, #tpu.memory_space<semaphore_mem>> -> memref<!tpu.dma_semaphore, #tpu.memory_space<semaphore_mem>>
    tpu.enqueue_dma source(%16 : memref<32xf32, #tpu.memory_space<any>>) target(%18 : memref<32xf32, #tpu.memory_space<vmem>>) target_semaphore(%20 : memref<!tpu.dma_semaphore, #tpu.memory_space<semaphore_mem>>)
    %c3 = arith.constant 3 : index
    %21 = memref.load %arg0[%c3] : memref<8xi32, #tpu.memory_space<smem>>
    %c3_i32 = arith.constant 3 : i32
    %c3_i32_9 = arith.constant 3 : i32
    %c0_i32_10 = arith.constant 0 : i32
    %22 = tpu.memref_slice %arg1[%21, %c0_i32_10] : memref<1000x32xf32, #tpu.memory_space<any>> -> memref<1x32xf32, #tpu.memory_space<any>>
    %23 = tpu.memref_squeeze %22 : memref<1x32xf32, #tpu.memory_space<any>> -> memref<32xf32, #tpu.memory_space<any>>
    %c0_i32_11 = arith.constant 0 : i32
    %24 = tpu.memref_slice %arg4[%c3_i32, %c0_i32_11] : memref<8x32xf32, #tpu.memory_space<vmem>> -> memref<1x32xf32, #tpu.memory_space<vmem>>
    %25 = tpu.memref_squeeze %24 : memref<1x32xf32, #tpu.memory_space<vmem>> -> memref<32xf32, #tpu.memory_space<vmem>>
    %26 = tpu.memref_slice %arg5[%c3_i32_9] : memref<8x!tpu.dma_semaphore, #tpu.memory_space<semaphore_mem>> -> memref<1x!tpu.dma_semaphore, #tpu.memory_space<semaphore_mem>>
    %27 = tpu.memref_squeeze %26 : memref<1x!tpu.dma_semaphore, #tpu.memory_space<semaphore_mem>> -> memref<!tpu.dma_semaphore, #tpu.memory_space<semaphore_mem>>
    tpu.enqueue_dma source(%23 : memref<32xf32, #tpu.memory_space<any>>) target(%25 : memref<32xf32, #tpu.memory_space<vmem>>) target_semaphore(%27 : memref<!tpu.dma_semaphore, #tpu.memory_space<semaphore_mem>>)
    %c4 = arith.constant 4 : index
    %28 = memref.load %arg0[%c4] : memref<8xi32, #tpu.memory_space<smem>>
    %c4_i32 = arith.constant 4 : i32
    %c4_i32_12 = arith.constant 4 : i32
    %c0_i32_13 = arith.constant 0 : i32
    %29 = tpu.memref_slice %arg1[%28, %c0_i32_13] : memref<1000x32xf32, #tpu.memory_space<any>> -> memref<1x32xf32, #tpu.memory_space<any>>
    %30 = tpu.memref_squeeze %29 : memref<1x32xf32, #tpu.memory_space<any>> -> memref<32xf32, #tpu.memory_space<any>>
    %c0_i32_14 = arith.constant 0 : i32
    %31 = tpu.memref_slice %arg4[%c4_i32, %c0_i32_14] : memref<8x32xf32, #tpu.memory_space<vmem>> -> memref<1x32xf32, #tpu.memory_space<vmem>>
    %32 = tpu.memref_squeeze %31 : memref<1x32xf32, #tpu.memory_space<vmem>> -> memref<32xf32, #tpu.memory_space<vmem>>
    %33 = tpu.memref_slice %arg5[%c4_i32_12] : memref<8x!tpu.dma_semaphore, #tpu.memory_space<semaphore_mem>> -> memref<1x!tpu.dma_semaphore, #tpu.memory_space<semaphore_mem>>
    %34 = tpu.memref_squeeze %33 : memref<1x!tpu.dma_semaphore, #tpu.memory_space<semaphore_mem>> -> memref<!tpu.dma_semaphore, #tpu.memory_space<semaphore_mem>>
    tpu.enqueue_dma source(%30 : memref<32xf32, #tpu.memory_space<any>>) target(%32 : memref<32xf32, #tpu.memory_space<vmem>>) target_semaphore(%34 : memref<!tpu.dma_semaphore, #tpu.memory_space<semaphore_mem>>)
    %c5 = arith.constant 5 : index
    %35 = memref.load %arg0[%c5] : memref<8xi32, #tpu.memory_space<smem>>
    %c5_i32 = arith.constant 5 : i32
    %c5_i32_15 = arith.constant 5 : i32
    %c0_i32_16 = arith.constant 0 : i32
    %36 = tpu.memref_slice %arg1[%35, %c0_i32_16] : memref<1000x32xf32, #tpu.memory_space<any>> -> memref<1x32xf32, #tpu.memory_space<any>>
    %37 = tpu.memref_squeeze %36 : memref<1x32xf32, #tpu.memory_space<any>> -> memref<32xf32, #tpu.memory_space<any>>
    %c0_i32_17 = arith.constant 0 : i32
    %38 = tpu.memref_slice %arg4[%c5_i32, %c0_i32_17] : memref<8x32xf32, #tpu.memory_space<vmem>> -> memref<1x32xf32, #tpu.memory_space<vmem>>
    %39 = tpu.memref_squeeze %38 : memref<1x32xf32, #tpu.memory_space<vmem>> -> memref<32xf32, #tpu.memory_space<vmem>>
    %40 = tpu.memref_slice %arg5[%c5_i32_15] : memref<8x!tpu.dma_semaphore, #tpu.memory_space<semaphore_mem>> -> memref<1x!tpu.dma_semaphore, #tpu.memory_space<semaphore_mem>>
    %41 = tpu.memref_squeeze %40 : memref<1x!tpu.dma_semaphore, #tpu.memory_space<semaphore_mem>> -> memref<!tpu.dma_semaphore, #tpu.memory_space<semaphore_mem>>
    tpu.enqueue_dma source(%37 : memref<32xf32, #tpu.memory_space<any>>) target(%39 : memref<32xf32, #tpu.memory_space<vmem>>) target_semaphore(%41 : memref<!tpu.dma_semaphore, #tpu.memory_space<semaphore_mem>>)
    %c6 = arith.constant 6 : index
    %42 = memref.load %arg0[%c6] : memref<8xi32, #tpu.memory_space<smem>>
    %c6_i32 = arith.constant 6 : i32
    %c6_i32_18 = arith.constant 6 : i32
    %c0_i32_19 = arith.constant 0 : i32
    %43 = tpu.memref_slice %arg1[%42, %c0_i32_19] : memref<1000x32xf32, #tpu.memory_space<any>> -> memref<1x32xf32, #tpu.memory_space<any>>
    %44 = tpu.memref_squeeze %43 : memref<1x32xf32, #tpu.memory_space<any>> -> memref<32xf32, #tpu.memory_space<any>>
    %c0_i32_20 = arith.constant 0 : i32
    %45 = tpu.memref_slice %arg4[%c6_i32, %c0_i32_20] : memref<8x32xf32, #tpu.memory_space<vmem>> -> memref<1x32xf32, #tpu.memory_space<vmem>>
    %46 = tpu.memref_squeeze %45 : memref<1x32xf32, #tpu.memory_space<vmem>> -> memref<32xf32, #tpu.memory_space<vmem>>
    %47 = tpu.memref_slice %arg5[%c6_i32_18] : memref<8x!tpu.dma_semaphore, #tpu.memory_space<semaphore_mem>> -> memref<1x!tpu.dma_semaphore, #tpu.memory_space<semaphore_mem>>
    %48 = tpu.memref_squeeze %47 : memref<1x!tpu.dma_semaphore, #tpu.memory_space<semaphore_mem>> -> memref<!tpu.dma_semaphore, #tpu.memory_space<semaphore_mem>>
    tpu.enqueue_dma source(%44 : memref<32xf32, #tpu.memory_space<any>>) target(%46 : memref<32xf32, #tpu.memory_space<vmem>>) target_semaphore(%48 : memref<!tpu.dma_semaphore, #tpu.memory_space<semaphore_mem>>)
    %c7 = arith.constant 7 : index
    %49 = memref.load %arg0[%c7] : memref<8xi32, #tpu.memory_space<smem>>
    %c7_i32 = arith.constant 7 : i32
    %c7_i32_21 = arith.constant 7 : i32
    %c0_i32_22 = arith.constant 0 : i32
    %50 = tpu.memref_slice %arg1[%49, %c0_i32_22] : memref<1000x32xf32, #tpu.memory_space<any>> -> memref<1x32xf32, #tpu.memory_space<any>>
    %51 = tpu.memref_squeeze %50 : memref<1x32xf32, #tpu.memory_space<any>> -> memref<32xf32, #tpu.memory_space<any>>
    %c0_i32_23 = arith.constant 0 : i32
    %52 = tpu.memref_slice %arg4[%c7_i32, %c0_i32_23] : memref<8x32xf32, #tpu.memory_space<vmem>> -> memref<1x32xf32, #tpu.memory_space<vmem>>
    %53 = tpu.memref_squeeze %52 : memref<1x32xf32, #tpu.memory_space<vmem>> -> memref<32xf32, #tpu.memory_space<vmem>>
    %54 = tpu.memref_slice %arg5[%c7_i32_21] : memref<8x!tpu.dma_semaphore, #tpu.memory_space<semaphore_mem>> -> memref<1x!tpu.dma_semaphore, #tpu.memory_space<semaphore_mem>>
    %55 = tpu.memref_squeeze %54 : memref<1x!tpu.dma_semaphore, #tpu.memory_space<semaphore_mem>> -> memref<!tpu.dma_semaphore, #tpu.memory_space<semaphore_mem>>
    tpu.enqueue_dma source(%51 : memref<32xf32, #tpu.memory_space<any>>) target(%53 : memref<32xf32, #tpu.memory_space<vmem>>) target_semaphore(%55 : memref<!tpu.dma_semaphore, #tpu.memory_space<semaphore_mem>>)
    %c0_i32_24 = arith.constant 0 : i32
    %c0_i32_25 = arith.constant 0 : i32
    %c0_i32_26 = arith.constant 0 : i32
    %56 = tpu.memref_slice %arg1[%0, %c0_i32_26] : memref<1000x32xf32, #tpu.memory_space<any>> -> memref<1x32xf32, #tpu.memory_space<any>>
    %57 = tpu.memref_squeeze %56 : memref<1x32xf32, #tpu.memory_space<any>> -> memref<32xf32, #tpu.memory_space<any>>
    %c0_i32_27 = arith.constant 0 : i32
    %58 = tpu.memref_slice %arg4[%c0_i32_24, %c0_i32_27] : memref<8x32xf32, #tpu.memory_space<vmem>> -> memref<1x32xf32, #tpu.memory_space<vmem>>
    %59 = tpu.memref_squeeze %58 : memref<1x32xf32, #tpu.memory_space<vmem>> -> memref<32xf32, #tpu.memory_space<vmem>>
    %60 = tpu.memref_slice %arg5[%c0_i32_25] : memref<8x!tpu.dma_semaphore, #tpu.memory_space<semaphore_mem>> -> memref<1x!tpu.dma_semaphore, #tpu.memory_space<semaphore_mem>>
    %61 = tpu.memref_squeeze %60 : memref<1x!tpu.dma_semaphore, #tpu.memory_space<semaphore_mem>> -> memref<!tpu.dma_semaphore, #tpu.memory_space<semaphore_mem>>
    tpu.wait_dma2 semaphore(%61 : memref<!tpu.dma_semaphore, #tpu.memory_space<semaphore_mem>>) src(%57 : memref<32xf32, #tpu.memory_space<any>>) dst(%59 : memref<32xf32, #tpu.memory_space<vmem>>)
    %c1_i32_28 = arith.constant 1 : i32
    %c1_i32_29 = arith.constant 1 : i32
    %c0_i32_30 = arith.constant 0 : i32
    %62 = tpu.memref_slice %arg1[%7, %c0_i32_30] : memref<1000x32xf32, #tpu.memory_space<any>> -> memref<1x32xf32, #tpu.memory_space<any>>
    %63 = tpu.memref_squeeze %62 : memref<1x32xf32, #tpu.memory_space<any>> -> memref<32xf32, #tpu.memory_space<any>>
    %c0_i32_31 = arith.constant 0 : i32
    %64 = tpu.memref_slice %arg4[%c1_i32_28, %c0_i32_31] : memref<8x32xf32, #tpu.memory_space<vmem>> -> memref<1x32xf32, #tpu.memory_space<vmem>>
    %65 = tpu.memref_squeeze %64 : memref<1x32xf32, #tpu.memory_space<vmem>> -> memref<32xf32, #tpu.memory_space<vmem>>
    %66 = tpu.memref_slice %arg5[%c1_i32_29] : memref<8x!tpu.dma_semaphore, #tpu.memory_space<semaphore_mem>> -> memref<1x!tpu.dma_semaphore, #tpu.memory_space<semaphore_mem>>
    %67 = tpu.memref_squeeze %66 : memref<1x!tpu.dma_semaphore, #tpu.memory_space<semaphore_mem>> -> memref<!tpu.dma_semaphore, #tpu.memory_space<semaphore_mem>>
    tpu.wait_dma2 semaphore(%67 : memref<!tpu.dma_semaphore, #tpu.memory_space<semaphore_mem>>) src(%63 : memref<32xf32, #tpu.memory_space<any>>) dst(%65 : memref<32xf32, #tpu.memory_space<vmem>>)
    %c2_i32_32 = arith.constant 2 : i32
    %c2_i32_33 = arith.constant 2 : i32
    %c0_i32_34 = arith.constant 0 : i32
    %68 = tpu.memref_slice %arg1[%14, %c0_i32_34] : memref<1000x32xf32, #tpu.memory_space<any>> -> memref<1x32xf32, #tpu.memory_space<any>>
    %69 = tpu.memref_squeeze %68 : memref<1x32xf32, #tpu.memory_space<any>> -> memref<32xf32, #tpu.memory_space<any>>
    %c0_i32_35 = arith.constant 0 : i32
    %70 = tpu.memref_slice %arg4[%c2_i32_32, %c0_i32_35] : memref<8x32xf32, #tpu.memory_space<vmem>> -> memref<1x32xf32, #tpu.memory_space<vmem>>
    %71 = tpu.memref_squeeze %70 : memref<1x32xf32, #tpu.memory_space<vmem>> -> memref<32xf32, #tpu.memory_space<vmem>>
    %72 = tpu.memref_slice %arg5[%c2_i32_33] : memref<8x!tpu.dma_semaphore, #tpu.memory_space<semaphore_mem>> -> memref<1x!tpu.dma_semaphore, #tpu.memory_space<semaphore_mem>>
    %73 = tpu.memref_squeeze %72 : memref<1x!tpu.dma_semaphore, #tpu.memory_space<semaphore_mem>> -> memref<!tpu.dma_semaphore, #tpu.memory_space<semaphore_mem>>
    tpu.wait_dma2 semaphore(%73 : memref<!tpu.dma_semaphore, #tpu.memory_space<semaphore_mem>>) src(%69 : memref<32xf32, #tpu.memory_space<any>>) dst(%71 : memref<32xf32, #tpu.memory_space<vmem>>)
    %c3_i32_36 = arith.constant 3 : i32
    %c3_i32_37 = arith.constant 3 : i32
    %c0_i32_38 = arith.constant 0 : i32
    %74 = tpu.memref_slice %arg1[%21, %c0_i32_38] : memref<1000x32xf32, #tpu.memory_space<any>> -> memref<1x32xf32, #tpu.memory_space<any>>
    %75 = tpu.memref_squeeze %74 : memref<1x32xf32, #tpu.memory_space<any>> -> memref<32xf32, #tpu.memory_space<any>>
    %c0_i32_39 = arith.constant 0 : i32
    %76 = tpu.memref_slice %arg4[%c3_i32_36, %c0_i32_39] : memref<8x32xf32, #tpu.memory_space<vmem>> -> memref<1x32xf32, #tpu.memory_space<vmem>>
    %77 = tpu.memref_squeeze %76 : memref<1x32xf32, #tpu.memory_space<vmem>> -> memref<32xf32, #tpu.memory_space<vmem>>
    %78 = tpu.memref_slice %arg5[%c3_i32_37] : memref<8x!tpu.dma_semaphore, #tpu.memory_space<semaphore_mem>> -> memref<1x!tpu.dma_semaphore, #tpu.memory_space<semaphore_mem>>
    %79 = tpu.memref_squeeze %78 : memref<1x!tpu.dma_semaphore, #tpu.memory_space<semaphore_mem>> -> memref<!tpu.dma_semaphore, #tpu.memory_space<semaphore_mem>>
    tpu.wait_dma2 semaphore(%79 : memref<!tpu.dma_semaphore, #tpu.memory_space<semaphore_mem>>) src(%75 : memref<32xf32, #tpu.memory_space<any>>) dst(%77 : memref<32xf32, #tpu.memory_space<vmem>>)
    %c4_i32_40 = arith.constant 4 : i32
    %c4_i32_41 = arith.constant 4 : i32
    %c0_i32_42 = arith.constant 0 : i32
    %80 = tpu.memref_slice %arg1[%28, %c0_i32_42] : memref<1000x32xf32, #tpu.memory_space<any>> -> memref<1x32xf32, #tpu.memory_space<any>>
    %81 = tpu.memref_squeeze %80 : memref<1x32xf32, #tpu.memory_space<any>> -> memref<32xf32, #tpu.memory_space<any>>
    %c0_i32_43 = arith.constant 0 : i32
    %82 = tpu.memref_slice %arg4[%c4_i32_40, %c0_i32_43] : memref<8x32xf32, #tpu.memory_space<vmem>> -> memref<1x32xf32, #tpu.memory_space<vmem>>
    %83 = tpu.memref_squeeze %82 : memref<1x32xf32, #tpu.memory_space<vmem>> -> memref<32xf32, #tpu.memory_space<vmem>>
    %84 = tpu.memref_slice %arg5[%c4_i32_41] : memref<8x!tpu.dma_semaphore, #tpu.memory_space<semaphore_mem>> -> memref<1x!tpu.dma_semaphore, #tpu.memory_space<semaphore_mem>>
    %85 = tpu.memref_squeeze %84 : memref<1x!tpu.dma_semaphore, #tpu.memory_space<semaphore_mem>> -> memref<!tpu.dma_semaphore, #tpu.memory_space<semaphore_mem>>
    tpu.wait_dma2 semaphore(%85 : memref<!tpu.dma_semaphore, #tpu.memory_space<semaphore_mem>>) src(%81 : memref<32xf32, #tpu.memory_space<any>>) dst(%83 : memref<32xf32, #tpu.memory_space<vmem>>)
    %c5_i32_44 = arith.constant 5 : i32
    %c5_i32_45 = arith.constant 5 : i32
    %c0_i32_46 = arith.constant 0 : i32
    %86 = tpu.memref_slice %arg1[%35, %c0_i32_46] : memref<1000x32xf32, #tpu.memory_space<any>> -> memref<1x32xf32, #tpu.memory_space<any>>
    %87 = tpu.memref_squeeze %86 : memref<1x32xf32, #tpu.memory_space<any>> -> memref<32xf32, #tpu.memory_space<any>>
    %c0_i32_47 = arith.constant 0 : i32
    %88 = tpu.memref_slice %arg4[%c5_i32_44, %c0_i32_47] : memref<8x32xf32, #tpu.memory_space<vmem>> -> memref<1x32xf32, #tpu.memory_space<vmem>>
    %89 = tpu.memref_squeeze %88 : memref<1x32xf32, #tpu.memory_space<vmem>> -> memref<32xf32, #tpu.memory_space<vmem>>
    %90 = tpu.memref_slice %arg5[%c5_i32_45] : memref<8x!tpu.dma_semaphore, #tpu.memory_space<semaphore_mem>> -> memref<1x!tpu.dma_semaphore, #tpu.memory_space<semaphore_mem>>
    %91 = tpu.memref_squeeze %90 : memref<1x!tpu.dma_semaphore, #tpu.memory_space<semaphore_mem>> -> memref<!tpu.dma_semaphore, #tpu.memory_space<semaphore_mem>>
    tpu.wait_dma2 semaphore(%91 : memref<!tpu.dma_semaphore, #tpu.memory_space<semaphore_mem>>) src(%87 : memref<32xf32, #tpu.memory_space<any>>) dst(%89 : memref<32xf32, #tpu.memory_space<vmem>>)
    %c6_i32_48 = arith.constant 6 : i32
    %c6_i32_49 = arith.constant 6 : i32
    %c0_i32_50 = arith.constant 0 : i32
    %92 = tpu.memref_slice %arg1[%42, %c0_i32_50] : memref<1000x32xf32, #tpu.memory_space<any>> -> memref<1x32xf32, #tpu.memory_space<any>>
    %93 = tpu.memref_squeeze %92 : memref<1x32xf32, #tpu.memory_space<any>> -> memref<32xf32, #tpu.memory_space<any>>
    %c0_i32_51 = arith.constant 0 : i32
    %94 = tpu.memref_slice %arg4[%c6_i32_48, %c0_i32_51] : memref<8x32xf32, #tpu.memory_space<vmem>> -> memref<1x32xf32, #tpu.memory_space<vmem>>
    %95 = tpu.memref_squeeze %94 : memref<1x32xf32, #tpu.memory_space<vmem>> -> memref<32xf32, #tpu.memory_space<vmem>>
    %96 = tpu.memref_slice %arg5[%c6_i32_49] : memref<8x!tpu.dma_semaphore, #tpu.memory_space<semaphore_mem>> -> memref<1x!tpu.dma_semaphore, #tpu.memory_space<semaphore_mem>>
    %97 = tpu.memref_squeeze %96 : memref<1x!tpu.dma_semaphore, #tpu.memory_space<semaphore_mem>> -> memref<!tpu.dma_semaphore, #tpu.memory_space<semaphore_mem>>
    tpu.wait_dma2 semaphore(%97 : memref<!tpu.dma_semaphore, #tpu.memory_space<semaphore_mem>>) src(%93 : memref<32xf32, #tpu.memory_space<any>>) dst(%95 : memref<32xf32, #tpu.memory_space<vmem>>)
    %c7_i32_52 = arith.constant 7 : i32
    %c7_i32_53 = arith.constant 7 : i32
    %c0_i32_54 = arith.constant 0 : i32
    %98 = tpu.memref_slice %arg1[%49, %c0_i32_54] : memref<1000x32xf32, #tpu.memory_space<any>> -> memref<1x32xf32, #tpu.memory_space<any>>
    %99 = tpu.memref_squeeze %98 : memref<1x32xf32, #tpu.memory_space<any>> -> memref<32xf32, #tpu.memory_space<any>>
    %c0_i32_55 = arith.constant 0 : i32
    %100 = tpu.memref_slice %arg4[%c7_i32_52, %c0_i32_55] : memref<8x32xf32, #tpu.memory_space<vmem>> -> memref<1x32xf32, #tpu.memory_space<vmem>>
    %101 = tpu.memref_squeeze %100 : memref<1x32xf32, #tpu.memory_space<vmem>> -> memref<32xf32, #tpu.memory_space<vmem>>
    %102 = tpu.memref_slice %arg5[%c7_i32_53] : memref<8x!tpu.dma_semaphore, #tpu.memory_space<semaphore_mem>> -> memref<1x!tpu.dma_semaphore, #tpu.memory_space<semaphore_mem>>
    %103 = tpu.memref_squeeze %102 : memref<1x!tpu.dma_semaphore, #tpu.memory_space<semaphore_mem>> -> memref<!tpu.dma_semaphore, #tpu.memory_space<semaphore_mem>>
    tpu.wait_dma2 semaphore(%103 : memref<!tpu.dma_semaphore, #tpu.memory_space<semaphore_mem>>) src(%99 : memref<32xf32, #tpu.memory_space<any>>) dst(%101 : memref<32xf32, #tpu.memory_space<vmem>>)
    %c0_56 = arith.constant 0 : index
    %c0_57 = arith.constant 0 : index
    %104 = vector.load %arg2[%c0_56, %c0_57] : memref<112x64xf32, #tpu.memory_space<vmem>>, vector<32x64xf32>
    %c32 = arith.constant 32 : index
    %c0_58 = arith.constant 0 : index
    %105 = vector.load %arg2[%c32, %c0_58] : memref<112x64xf32, #tpu.memory_space<vmem>>, vector<1x64xf32>
    %c40 = arith.constant 40 : index
    %c0_59 = arith.constant 0 : index
    %106 = vector.load %arg2[%c40, %c0_59] : memref<112x64xf32, #tpu.memory_space<vmem>>, vector<64x64xf32>
    %c104 = arith.constant 104 : index
    %c0_60 = arith.constant 0 : index
    %107 = vector.load %arg2[%c104, %c0_60] : memref<112x64xf32, #tpu.memory_space<vmem>>, vector<1x64xf32>
    %c0_61 = arith.constant 0 : index
    %c0_62 = arith.constant 0 : index
    %108 = vector.load %arg4[%c0_61, %c0_62] : memref<8x32xf32, #tpu.memory_space<vmem>>, vector<8x32xf32>
    %cst = arith.constant dense<0.000000e+00> : vector<8x64xf32>
    %109 = tpu.matmul %108, %104, %cst {dimension_numbers = #tpu.dot_dimension_numbers<[1], [0], [0], [1], [0, 0, 1, 1], [], []>} : vector<8x32xf32>, vector<32x64xf32>, vector<8x64xf32> -> vector<8x64xf32>
    %110 = vector.broadcast %105 : vector<1x64xf32> to vector<8x64xf32>
    %111 = arith.addf %109, %110 : vector<8x64xf32>
    %112 = arith.negf %111 : vector<8x64xf32>
    %113 = math.exp %112 : vector<8x64xf32>
    %cst_63 = arith.constant 1.000000e+00 : f32
    %114 = vector.broadcast %cst_63 : f32 to vector<8x64xf32>
    %115 = arith.addf %114, %113 : vector<8x64xf32>
    %116 = arith.divf %114, %115 : vector<8x64xf32>
    %117 = arith.mulf %111, %116 : vector<8x64xf32>
    %cst_64 = arith.constant dense<0.000000e+00> : vector<8x64xf32>
    %118 = tpu.matmul %117, %106, %cst_64 {dimension_numbers = #tpu.dot_dimension_numbers<[1], [0], [0], [1], [0, 0, 1, 1], [], []>} : vector<8x64xf32>, vector<64x64xf32>, vector<8x64xf32> -> vector<8x64xf32>
    %119 = vector.broadcast %107 : vector<1x64xf32> to vector<8x64xf32>
    %120 = arith.addf %118, %119 : vector<8x64xf32>
    %c0_65 = arith.constant 0 : index
    %c0_66 = arith.constant 0 : index
    %121 = vector.load %arg3[%c0_65, %c0_66] : memref<8x64xf32, #tpu.memory_space<vmem>>, vector<8x64xf32>
    tpu.vector_store %arg3[%c0_65, %c0_66], %120 {strides = array<i32>} : memref<8x64xf32, #tpu.memory_space<vmem>>, vector<8x64xf32>,
    return
  }
}

</mosaic_0001>

<llo_original>
// kernel: time_embedding_forward.1
$region0: #{time_embedding_forward.1}
  #allocation0 [shape = 'u32[]', space=smem, size = 0x4, offset = 0x4, fixed_abs, tag = 'smem constant byte address 0x4 - core index']
  #allocation1 [shape = 'u32[144,128]{1,0:T(1,128)}', space=vmem, size = 0x12000, scoped, tag = 'internal scratch']
  #allocation2 [shape = 'f32[8,32]{1,0:T(8,128)}', space=vmem, size = 0x1000, scoped, tag = 'scratch operand']
  #allocation3 [shape = 's32[8]{0}', space=sflag, size = 0x20, scoped, tag = 'scratch operand']
  #allocation8 [shape = 's32[]', space=sflag, size = 0x4, offset = 0, fixed_abs, tag = 'sflag constant byte address 0x0 - dummy sync flag']
  #allocation9 [shape = 's32[]', space=sflag, size = 0x4, offset = 0, fixed_abs, tag = 'sflag constant byte address 0x0 - dummy sync flag']
  #allocation10 [shape = 's32[]', space=sflag, size = 0x4, offset = 0, fixed_abs, tag = 'sflag constant byte address 0x0 - dummy sync flag']
  #allocation11 [shape = 's32[]', space=sflag, size = 0x4, offset = 0, fixed_abs, tag = 'sflag constant byte address 0x0 - dummy sync flag']
  #allocation12 [shape = 's32[]', space=sflag, size = 0x4, offset = 0, fixed_abs, tag = 'sflag constant byte address 0x0 - dummy sync flag']
  #allocation13 [shape = 's32[]', space=sflag, size = 0x4, offset = 0, fixed_abs, tag = 'sflag constant byte address 0x0 - dummy sync flag']
  #allocation14 [shape = 's32[]', space=sflag, size = 0x4, offset = 0, fixed_abs, tag = 'sflag constant byte address 0x0 - dummy sync flag']
  #allocation15 [shape = 's32[]', space=sflag, size = 0x4, offset = 0, fixed_abs, tag = 'sflag constant byte address 0x0 - dummy sync flag']
  %s0 = inlined_call_operand.vmem [shape: s32[8], index: 0, kind: input, shape index: {}]
  %s1 = inlined_call_operand.vmem [shape: f32[1000,32], index: 1, kind: input, shape index: {}]
  %s2 = inlined_call_operand.vmem [shape: f32[112,64], index: 2, kind: input, shape index: {}]
  %s3 = inlined_call_operand.hbm [shape: f32[8,64], index: 3, kind: output, shape index: {}]
  %s4 = sld [smem:[#allocation0]]
  $region262: #{time_embedding_forward.1} parent=0
    _
  %s6 = ssub.s32 1, %s4
  %s7 = scalar_select 0, %s6, %s4
  $region1: #{time_embedding_forward.1} parent=0
    #allocation4 [shape = 'u8[512]{0}', space=smem, size = 0x200, scoped, tag = 'input window, operand 0, single buffered']
    #allocation5 [shape = 's32[1]{0}', space=sflag, size = 0x4, scoped, tag = 'scoped memory for time_embedding_forward.1']
    #allocation6 [shape = 's32[1]{0}', space=sflag, size = 0x4, scoped, tag = 'scoped memory for time_embedding_forward.1']
    #allocation7 [shape = 'u8[4096]{0}', space=vmem, size = 0x1000, scoped, tag = 'output window, operand 0, single buffered']
    %8 = vsyncpa [#allocation6], 0
    %9 = vsyncpa [#allocation5], 0
    // Predicated region
    $region2: #{time_embedding_forward.1} parent=1 // pred_check
      _
    $region3: #{time_embedding_forward.1} parent=1 // pred_check_branch
      %11 = sbr.rel (0) target = $region5
    $region4: #{time_embedding_forward.1} parent=1 // pred_region
      %s13 = ssub.s32 16, 16
      %14 = vsyncadd [#allocation6], %s13
      %s16 = sshll.u32 %s0, 4
      %s17 = int_to_ptr.vmem [resolvable:$true] %s16
      %19 = dma.vmem_to_smem %s17, 16, [#allocation4], [#allocation6]
    $region5: #{time_embedding_forward.1} parent=1 // pred_fallthru
      _
    // Predicated region
    $region6: #{time_embedding_forward.1} parent=1 // pred_check
      _
    $region7: #{time_embedding_forward.1} parent=1 // pred_check_branch
      %21 = sbr.rel (0) target = $region9
    $region8: #{time_embedding_forward.1} parent=1 // pred_region
      _
    $region9: #{time_embedding_forward.1} parent=1 // pred_fallthru
      _
    // Predicated region
    $region10: #{time_embedding_forward.1} parent=1 // pred_check
      _
    $region11: #{time_embedding_forward.1} parent=1 // pred_check_branch
      %23 = sbr.rel (0) target = $region13
    $region12: #{time_embedding_forward.1} parent=1 // pred_region
      %24 = dma.done [#allocation6], 16
    $region13: #{time_embedding_forward.1} parent=1 // pred_fallthru
      _
    %25 = sfence
    %s26 = sld [smem:[#allocation4]]
    %s27 = scalar_lea.vmem %s1, %s26
    %p29 = scmp.lt.u32.totalorder 1, 8
    %p30 = pneg %p29
    // Predicated region
    $region14: #{time_embedding_forward.1} parent=1 // pred_check
      _
    $region15: #{time_embedding_forward.1} parent=1 // pred_check_branch
      %32 = sbr.rel (%p29) target = $region17
    $region16: #{time_embedding_forward.1} parent=1 // pred_region
      %s47 = sand.u32 1, 7
      %p48 = scmp.eq.s32.totalorder %s47, 0
      %p49 = pneg %p48
      // Predicated region
      $region29: #{time_embedding_forward.1} parent=16 // pred_check
        _
      $region30: #{time_embedding_forward.1} parent=16 // pred_check_branch
        %51 = sbr.rel (%p48) target = $region32
      $region31: #{time_embedding_forward.1} parent=16 // pred_region
        %s52 = sand.u32 1, 7
        %s53 = ssub.s32 1, %s52
        %s54 = scalar_lea.vmem %s27, %s53
        %s55 = ssub.s32 1, %s52
        %s56 = scalar_lea.vmem [#allocation2], %s55
        %s57 = sshllo.u32 0, %s52
        loop: start=0, step=1, limit=1
        $region33: #{time_embedding_forward.1} parent=31 // loop_pre_header
          _
        $region34: #{time_embedding_forward.1} parent=31 // loop_header
          %s59 = sphi 0, %s63
          %p60 = scmp.ge.s32.totalorder %s59, 1
          %s64 = sphi %s54, %s54
          %s65 = sphi %s56, %s56
        $region35: #{time_embedding_forward.1} parent=31 // loop_header_branch
          %62 = sbr.rel (%p60) target = $region39
        $region36: #{time_embedding_forward.1} parent=31 // loop_body
          %v66 = vld [vmem:[%s64] sm:%s57]
          %67 = vst [vmem:[%s65] sm:%s57] %v66
        $region37: #{time_embedding_forward.1} parent=31 // loop_footer
          %s63 = sadd.s32 1, %s59
        $region38: #{time_embedding_forward.1} parent=31 // loop_footer_branch
          %58 = sbr.rel target = $region34
        $region39: #{time_embedding_forward.1} parent=31 // loop_exit
          _
      $region32: #{time_embedding_forward.1} parent=16 // pred_fallthru
        _
    $region17: #{time_embedding_forward.1} parent=1 // pred_fallthru
      _
    // Predicated region
    $region18: #{time_embedding_forward.1} parent=1 // pred_check
      %p33 = pneg %p29
    $region19: #{time_embedding_forward.1} parent=1 // pred_check_branch
      %35 = sbr.rel (%p33) target = $region21
    $region20: #{time_embedding_forward.1} parent=1 // pred_region
      %s36 = sshllo.u32 0, 1
      loop: start=0, step=1, limit=1
      $region22: #{time_embedding_forward.1} parent=20 // loop_pre_header
        _
      $region23: #{time_embedding_forward.1} parent=20 // loop_header
        %s38 = sphi 0, %s42
        %p39 = scmp.ge.s32.totalorder %s38, 1
        %s43 = sphi %s27, %s27
        %s44 = sphi [#allocation2], [#allocation2]
      $region24: #{time_embedding_forward.1} parent=20 // loop_header_branch
        %41 = sbr.rel (%p39) target = $region28
      $region25: #{time_embedding_forward.1} parent=20 // loop_body
        %v45 = vld [vmem:[%s43] sm:%s36]
        %46 = vst [vmem:[%s44] sm:%s36] %v45
      $region26: #{time_embedding_forward.1} parent=20 // loop_footer
        %s42 = sadd.s32 1, %s38
      $region27: #{time_embedding_forward.1} parent=20 // loop_footer_branch
        %37 = sbr.rel target = $region23
      $region28: #{time_embedding_forward.1} parent=20 // loop_exit
        _
    $region21: #{time_embedding_forward.1} parent=1 // pred_fallthru
      _
    // Predicated region
    $region40: #{time_embedding_forward.1} parent=1 // pred_check
      _
    $region41: #{time_embedding_forward.1} parent=1 // pred_check_branch
      %70 = sbr.rel (0) target = $region43
    $region42: #{time_embedding_forward.1} parent=1 // pred_region
      %71 = vsyncadd [#allocation3], 16
    $region43: #{time_embedding_forward.1} parent=1 // pred_fallthru
      _
    %s72 = sld [smem:[#allocation4 + $0x1]]
    %s73 = scalar_lea.vmem %s1, %s72
    %s74 = scalar_lea.vmem [#allocation2], 1
    %s75 = scalar_lea.sflag [#allocation3], 1
    %p77 = scmp.lt.u32.totalorder 1, 8
    %p78 = pneg %p77
    // Predicated region
    $region44: #{time_embedding_forward.1} parent=1 // pred_check
      _
    $region45: #{time_embedding_forward.1} parent=1 // pred_check_branch
      %80 = sbr.rel (%p77) target = $region47
    $region46: #{time_embedding_forward.1} parent=1 // pred_region
      %s95 = sand.u32 1, 7
      %p96 = scmp.eq.s32.totalorder %s95, 0
      %p97 = pneg %p96
      // Predicated region
      $region59: #{time_embedding_forward.1} parent=46 // pred_check
        _
      $region60: #{time_embedding_forward.1} parent=46 // pred_check_branch
        %99 = sbr.rel (%p96) target = $region62
      $region61: #{time_embedding_forward.1} parent=46 // pred_region
        %s100 = sand.u32 1, 7
        %s101 = ssub.s32 1, %s100
        %s102 = scalar_lea.vmem %s73, %s101
        %s103 = ssub.s32 1, %s100
        %s104 = scalar_lea.vmem %s74, %s103 [#allocation2]
        %s105 = sshllo.u32 0, %s100
        loop: start=0, step=1, limit=1
        $region63: #{time_embedding_forward.1} parent=61 // loop_pre_header
          _
        $region64: #{time_embedding_forward.1} parent=61 // loop_header
          %s107 = sphi 0, %s111
          %p108 = scmp.ge.s32.totalorder %s107, 1
          %s112 = sphi %s102, %s102
          %s113 = sphi %s104, %s104
        $region65: #{time_embedding_forward.1} parent=61 // loop_header_branch
          %110 = sbr.rel (%p108) target = $region69
        $region66: #{time_embedding_forward.1} parent=61 // loop_body
          %v114 = vld [vmem:[%s112] sm:%s105]
          %115 = vst [vmem:[%s113] sm:%s105] %v114
        $region67: #{time_embedding_forward.1} parent=61 // loop_footer
          %s111 = sadd.s32 1, %s107
        $region68: #{time_embedding_forward.1} parent=61 // loop_footer_branch
          %106 = sbr.rel target = $region64
        $region69: #{time_embedding_forward.1} parent=61 // loop_exit
          _
      $region62: #{time_embedding_forward.1} parent=46 // pred_fallthru
        _
    $region47: #{time_embedding_forward.1} parent=1 // pred_fallthru
      _
    // Predicated region
    $region48: #{time_embedding_forward.1} parent=1 // pred_check
      %p81 = pneg %p77
    $region49: #{time_embedding_forward.1} parent=1 // pred_check_branch
      %83 = sbr.rel (%p81) target = $region51
    $region50: #{time_embedding_forward.1} parent=1 // pred_region
      %s84 = sshllo.u32 0, 1
      loop: start=0, step=1, limit=1
      $region52: #{time_embedding_forward.1} parent=50 // loop_pre_header
        _
      $region53: #{time_embedding_forward.1} parent=50 // loop_header
        %s86 = sphi 0, %s90
        %p87 = scmp.ge.s32.totalorder %s86, 1
        %s91 = sphi %s73, %s73
        %s92 = sphi %s74, %s74
      $region54: #{time_embedding_forward.1} parent=50 // loop_header_branch
        %89 = sbr.rel (%p87) target = $region58
      $region55: #{time_embedding_forward.1} parent=50 // loop_body
        %v93 = vld [vmem:[%s91] sm:%s84]
        %94 = vst [vmem:[%s92] sm:%s84] %v93
      $region56: #{time_embedding_forward.1} parent=50 // loop_footer
        %s90 = sadd.s32 1, %s86
      $region57: #{time_embedding_forward.1} parent=50 // loop_footer_branch
        %85 = sbr.rel target = $region53
      $region58: #{time_embedding_forward.1} parent=50 // loop_exit
        _
    $region51: #{time_embedding_forward.1} parent=1 // pred_fallthru
      _
    // Predicated region
    $region70: #{time_embedding_forward.1} parent=1 // pred_check
      _
    $region71: #{time_embedding_forward.1} parent=1 // pred_check_branch
      %118 = sbr.rel (0) target = $region73
    $region72: #{time_embedding_forward.1} parent=1 // pred_region
      %119 = vsyncadd %s75, 16
    $region73: #{time_embedding_forward.1} parent=1 // pred_fallthru
      _
    %s120 = sld [smem:[#allocation4 + $0x2]]
    %s121 = scalar_lea.vmem %s1, %s120
    %s122 = scalar_lea.vmem [#allocation2], 2
    %s123 = scalar_lea.sflag [#allocation3], 2
    %p125 = scmp.lt.u32.totalorder 1, 8
    %p126 = pneg %p125
    // Predicated region
    $region74: #{time_embedding_forward.1} parent=1 // pred_check
      _
    $region75: #{time_embedding_forward.1} parent=1 // pred_check_branch
      %128 = sbr.rel (%p125) target = $region77
    $region76: #{time_embedding_forward.1} parent=1 // pred_region
      %s143 = sand.u32 1, 7
      %p144 = scmp.eq.s32.totalorder %s143, 0
      %p145 = pneg %p144
      // Predicated region
      $region89: #{time_embedding_forward.1} parent=76 // pred_check
        _
      $region90: #{time_embedding_forward.1} parent=76 // pred_check_branch
        %147 = sbr.rel (%p144) target = $region92
      $region91: #{time_embedding_forward.1} parent=76 // pred_region
        %s148 = sand.u32 1, 7
        %s149 = ssub.s32 1, %s148
        %s150 = scalar_lea.vmem %s121, %s149
        %s151 = ssub.s32 1, %s148
        %s152 = scalar_lea.vmem %s122, %s151 [#allocation2]
        %s153 = sshllo.u32 0, %s148
        loop: start=0, step=1, limit=1
        $region93: #{time_embedding_forward.1} parent=91 // loop_pre_header
          _
        $region94: #{time_embedding_forward.1} parent=91 // loop_header
          %s155 = sphi 0, %s159
          %p156 = scmp.ge.s32.totalorder %s155, 1
          %s160 = sphi %s150, %s150
          %s161 = sphi %s152, %s152
        $region95: #{time_embedding_forward.1} parent=91 // loop_header_branch
          %158 = sbr.rel (%p156) target = $region99
        $region96: #{time_embedding_forward.1} parent=91 // loop_body
          %v162 = vld [vmem:[%s160] sm:%s153]
          %163 = vst [vmem:[%s161] sm:%s153] %v162
        $region97: #{time_embedding_forward.1} parent=91 // loop_footer
          %s159 = sadd.s32 1, %s155
        $region98: #{time_embedding_forward.1} parent=91 // loop_footer_branch
          %154 = sbr.rel target = $region94
        $region99: #{time_embedding_forward.1} parent=91 // loop_exit
          _
      $region92: #{time_embedding_forward.1} parent=76 // pred_fallthru
        _
    $region77: #{time_embedding_forward.1} parent=1 // pred_fallthru
      _
    // Predicated region
    $region78: #{time_embedding_forward.1} parent=1 // pred_check
      %p129 = pneg %p125
    $region79: #{time_embedding_forward.1} parent=1 // pred_check_branch
      %131 = sbr.rel (%p129) target = $region81
    $region80: #{time_embedding_forward.1} parent=1 // pred_region
      %s132 = sshllo.u32 0, 1
      loop: start=0, step=1, limit=1
      $region82: #{time_embedding_forward.1} parent=80 // loop_pre_header
        _
      $region83: #{time_embedding_forward.1} parent=80 // loop_header
        %s134 = sphi 0, %s138
        %p135 = scmp.ge.s32.totalorder %s134, 1
        %s139 = sphi %s121, %s121
        %s140 = sphi %s122, %s122
      $region84: #{time_embedding_forward.1} parent=80 // loop_header_branch
        %137 = sbr.rel (%p135) target = $region88
      $region85: #{time_embedding_forward.1} parent=80 // loop_body
        %v141 = vld [vmem:[%s139] sm:%s132]
        %142 = vst [vmem:[%s140] sm:%s132] %v141
      $region86: #{time_embedding_forward.1} parent=80 // loop_footer
        %s138 = sadd.s32 1, %s134
      $region87: #{time_embedding_forward.1} parent=80 // loop_footer_branch
        %133 = sbr.rel target = $region83
      $region88: #{time_embedding_forward.1} parent=80 // loop_exit
        _
    $region81: #{time_embedding_forward.1} parent=1 // pred_fallthru
      _
    // Predicated region
    $region100: #{time_embedding_forward.1} parent=1 // pred_check
      _
    $region101: #{time_embedding_forward.1} parent=1 // pred_check_branch
      %166 = sbr.rel (0) target = $region103
    $region102: #{time_embedding_forward.1} parent=1 // pred_region
      %167 = vsyncadd %s123, 16
    $region103: #{time_embedding_forward.1} parent=1 // pred_fallthru
      _
    %s168 = sld [smem:[#allocation4 + $0x3]]
    %s169 = scalar_lea.vmem %s1, %s168
    %s170 = scalar_lea.vmem [#allocation2], 3
    %s171 = scalar_lea.sflag [#allocation3], 3
    %p173 = scmp.lt.u32.totalorder 1, 8
    %p174 = pneg %p173
    // Predicated region
    $region104: #{time_embedding_forward.1} parent=1 // pred_check
      _
    $region105: #{time_embedding_forward.1} parent=1 // pred_check_branch
      %176 = sbr.rel (%p173) target = $region107
    $region106: #{time_embedding_forward.1} parent=1 // pred_region
      %s191 = sand.u32 1, 7
      %p192 = scmp.eq.s32.totalorder %s191, 0
      %p193 = pneg %p192
      // Predicated region
      $region119: #{time_embedding_forward.1} parent=106 // pred_check
        _
      $region120: #{time_embedding_forward.1} parent=106 // pred_check_branch
        %195 = sbr.rel (%p192) target = $region122
      $region121: #{time_embedding_forward.1} parent=106 // pred_region
        %s196 = sand.u32 1, 7
        %s197 = ssub.s32 1, %s196
        %s198 = scalar_lea.vmem %s169, %s197
        %s199 = ssub.s32 1, %s196
        %s200 = scalar_lea.vmem %s170, %s199 [#allocation2]
        %s201 = sshllo.u32 0, %s196
        loop: start=0, step=1, limit=1
        $region123: #{time_embedding_forward.1} parent=121 // loop_pre_header
          _
        $region124: #{time_embedding_forward.1} parent=121 // loop_header
          %s203 = sphi 0, %s207
          %p204 = scmp.ge.s32.totalorder %s203, 1
          %s208 = sphi %s198, %s198
          %s209 = sphi %s200, %s200
        $region125: #{time_embedding_forward.1} parent=121 // loop_header_branch
          %206 = sbr.rel (%p204) target = $region129
        $region126: #{time_embedding_forward.1} parent=121 // loop_body
          %v210 = vld [vmem:[%s208] sm:%s201]
          %211 = vst [vmem:[%s209] sm:%s201] %v210
        $region127: #{time_embedding_forward.1} parent=121 // loop_footer
          %s207 = sadd.s32 1, %s203
        $region128: #{time_embedding_forward.1} parent=121 // loop_footer_branch
          %202 = sbr.rel target = $region124
        $region129: #{time_embedding_forward.1} parent=121 // loop_exit
          _
      $region122: #{time_embedding_forward.1} parent=106 // pred_fallthru
        _
    $region107: #{time_embedding_forward.1} parent=1 // pred_fallthru
      _
    // Predicated region
    $region108: #{time_embedding_forward.1} parent=1 // pred_check
      %p177 = pneg %p173
    $region109: #{time_embedding_forward.1} parent=1 // pred_check_branch
      %179 = sbr.rel (%p177) target = $region111
    $region110: #{time_embedding_forward.1} parent=1 // pred_region
      %s180 = sshllo.u32 0, 1
      loop: start=0, step=1, limit=1
      $region112: #{time_embedding_forward.1} parent=110 // loop_pre_header
        _
      $region113: #{time_embedding_forward.1} parent=110 // loop_header
        %s182 = sphi 0, %s186
        %p183 = scmp.ge.s32.totalorder %s182, 1
        %s187 = sphi %s169, %s169
        %s188 = sphi %s170, %s170
      $region114: #{time_embedding_forward.1} parent=110 // loop_header_branch
        %185 = sbr.rel (%p183) target = $region118
      $region115: #{time_embedding_forward.1} parent=110 // loop_body
        %v189 = vld [vmem:[%s187] sm:%s180]
        %190 = vst [vmem:[%s188] sm:%s180] %v189
      $region116: #{time_embedding_forward.1} parent=110 // loop_footer
        %s186 = sadd.s32 1, %s182
      $region117: #{time_embedding_forward.1} parent=110 // loop_footer_branch
        %181 = sbr.rel target = $region113
      $region118: #{time_embedding_forward.1} parent=110 // loop_exit
        _
    $region111: #{time_embedding_forward.1} parent=1 // pred_fallthru
      _
    // Predicated region
    $region130: #{time_embedding_forward.1} parent=1 // pred_check
      _
    $region131: #{time_embedding_forward.1} parent=1 // pred_check_branch
      %214 = sbr.rel (0) target = $region133
    $region132: #{time_embedding_forward.1} parent=1 // pred_region
      %215 = vsyncadd %s171, 16
    $region133: #{time_embedding_forward.1} parent=1 // pred_fallthru
      _
    %s216 = sld [smem:[#allocation4 + $0x4]]
    %s217 = scalar_lea.vmem %s1, %s216
    %s218 = scalar_lea.vmem [#allocation2], 4
    %s219 = scalar_lea.sflag [#allocation3], 4
    %p221 = scmp.lt.u32.totalorder 1, 8
    %p222 = pneg %p221
    // Predicated region
    $region134: #{time_embedding_forward.1} parent=1 // pred_check
      _
    $region135: #{time_embedding_forward.1} parent=1 // pred_check_branch
      %224 = sbr.rel (%p221) target = $region137
    $region136: #{time_embedding_forward.1} parent=1 // pred_region
      %s239 = sand.u32 1, 7
      %p240 = scmp.eq.s32.totalorder %s239, 0
      %p241 = pneg %p240
      // Predicated region
      $region149: #{time_embedding_forward.1} parent=136 // pred_check
        _
      $region150: #{time_embedding_forward.1} parent=136 // pred_check_branch
        %243 = sbr.rel (%p240) target = $region152
      $region151: #{time_embedding_forward.1} parent=136 // pred_region
        %s244 = sand.u32 1, 7
        %s245 = ssub.s32 1, %s244
        %s246 = scalar_lea.vmem %s217, %s245
        %s247 = ssub.s32 1, %s244
        %s248 = scalar_lea.vmem %s218, %s247 [#allocation2]
        %s249 = sshllo.u32 0, %s244
        loop: start=0, step=1, limit=1
        $region153: #{time_embedding_forward.1} parent=151 // loop_pre_header
          _
        $region154: #{time_embedding_forward.1} parent=151 // loop_header
          %s251 = sphi 0, %s255
          %p252 = scmp.ge.s32.totalorder %s251, 1
          %s256 = sphi %s246, %s246
          %s257 = sphi %s248, %s248
        $region155: #{time_embedding_forward.1} parent=151 // loop_header_branch
          %254 = sbr.rel (%p252) target = $region159
        $region156: #{time_embedding_forward.1} parent=151 // loop_body
          %v258 = vld [vmem:[%s256] sm:%s249]
          %259 = vst [vmem:[%s257] sm:%s249] %v258
        $region157: #{time_embedding_forward.1} parent=151 // loop_footer
          %s255 = sadd.s32 1, %s251
        $region158: #{time_embedding_forward.1} parent=151 // loop_footer_branch
          %250 = sbr.rel target = $region154
        $region159: #{time_embedding_forward.1} parent=151 // loop_exit
          _
      $region152: #{time_embedding_forward.1} parent=136 // pred_fallthru
        _
    $region137: #{time_embedding_forward.1} parent=1 // pred_fallthru
      _
    // Predicated region
    $region138: #{time_embedding_forward.1} parent=1 // pred_check
      %p225 = pneg %p221
    $region139: #{time_embedding_forward.1} parent=1 // pred_check_branch
      %227 = sbr.rel (%p225) target = $region141
    $region140: #{time_embedding_forward.1} parent=1 // pred_region
      %s228 = sshllo.u32 0, 1
      loop: start=0, step=1, limit=1
      $region142: #{time_embedding_forward.1} parent=140 // loop_pre_header
        _
      $region143: #{time_embedding_forward.1} parent=140 // loop_header
        %s230 = sphi 0, %s234
        %p231 = scmp.ge.s32.totalorder %s230, 1
        %s235 = sphi %s217, %s217
        %s236 = sphi %s218, %s218
      $region144: #{time_embedding_forward.1} parent=140 // loop_header_branch
        %233 = sbr.rel (%p231) target = $region148
      $region145: #{time_embedding_forward.1} parent=140 // loop_body
        %v237 = vld [vmem:[%s235] sm:%s228]
        %238 = vst [vmem:[%s236] sm:%s228] %v237
      $region146: #{time_embedding_forward.1} parent=140 // loop_footer
        %s234 = sadd.s32 1, %s230
      $region147: #{time_embedding_forward.1} parent=140 // loop_footer_branch
        %229 = sbr.rel target = $region143
      $region148: #{time_embedding_forward.1} parent=140 // loop_exit
        _
    $region141: #{time_embedding_forward.1} parent=1 // pred_fallthru
      _
    // Predicated region
    $region160: #{time_embedding_forward.1} parent=1 // pred_check
      _
    $region161: #{time_embedding_forward.1} parent=1 // pred_check_branch
      %262 = sbr.rel (0) target = $region163
    $region162: #{time_embedding_forward.1} parent=1 // pred_region
      %263 = vsyncadd %s219, 16
    $region163: #{time_embedding_forward.1} parent=1 // pred_fallthru
      _
    %s264 = sld [smem:[#allocation4 + $0x5]]
    %s265 = scalar_lea.vmem %s1, %s264
    %s266 = scalar_lea.vmem [#allocation2], 5
    %s267 = scalar_lea.sflag [#allocation3], 5
    %p269 = scmp.lt.u32.totalorder 1, 8
    %p270 = pneg %p269
    // Predicated region
    $region164: #{time_embedding_forward.1} parent=1 // pred_check
      _
    $region165: #{time_embedding_forward.1} parent=1 // pred_check_branch
      %272 = sbr.rel (%p269) target = $region167
    $region166: #{time_embedding_forward.1} parent=1 // pred_region
      %s287 = sand.u32 1, 7
      %p288 = scmp.eq.s32.totalorder %s287, 0
      %p289 = pneg %p288
      // Predicated region
      $region179: #{time_embedding_forward.1} parent=166 // pred_check
        _
      $region180: #{time_embedding_forward.1} parent=166 // pred_check_branch
        %291 = sbr.rel (%p288) target = $region182
      $region181: #{time_embedding_forward.1} parent=166 // pred_region
        %s292 = sand.u32 1, 7
        %s293 = ssub.s32 1, %s292
        %s294 = scalar_lea.vmem %s265, %s293
        %s295 = ssub.s32 1, %s292
        %s296 = scalar_lea.vmem %s266, %s295 [#allocation2]
        %s297 = sshllo.u32 0, %s292
        loop: start=0, step=1, limit=1
        $region183: #{time_embedding_forward.1} parent=181 // loop_pre_header
          _
        $region184: #{time_embedding_forward.1} parent=181 // loop_header
          %s299 = sphi 0, %s303
          %p300 = scmp.ge.s32.totalorder %s299, 1
          %s304 = sphi %s294, %s294
          %s305 = sphi %s296, %s296
        $region185: #{time_embedding_forward.1} parent=181 // loop_header_branch
          %302 = sbr.rel (%p300) target = $region189
        $region186: #{time_embedding_forward.1} parent=181 // loop_body
          %v306 = vld [vmem:[%s304] sm:%s297]
          %307 = vst [vmem:[%s305] sm:%s297] %v306
        $region187: #{time_embedding_forward.1} parent=181 // loop_footer
          %s303 = sadd.s32 1, %s299
        $region188: #{time_embedding_forward.1} parent=181 // loop_footer_branch
          %298 = sbr.rel target = $region184
        $region189: #{time_embedding_forward.1} parent=181 // loop_exit
          _
      $region182: #{time_embedding_forward.1} parent=166 // pred_fallthru
        _
    $region167: #{time_embedding_forward.1} parent=1 // pred_fallthru
      _
    // Predicated region
    $region168: #{time_embedding_forward.1} parent=1 // pred_check
      %p273 = pneg %p269
    $region169: #{time_embedding_forward.1} parent=1 // pred_check_branch
      %275 = sbr.rel (%p273) target = $region171
    $region170: #{time_embedding_forward.1} parent=1 // pred_region
      %s276 = sshllo.u32 0, 1
      loop: start=0, step=1, limit=1
      $region172: #{time_embedding_forward.1} parent=170 // loop_pre_header
        _
      $region173: #{time_embedding_forward.1} parent=170 // loop_header
        %s278 = sphi 0, %s282
        %p279 = scmp.ge.s32.totalorder %s278, 1
        %s283 = sphi %s265, %s265
        %s284 = sphi %s266, %s266
      $region174: #{time_embedding_forward.1} parent=170 // loop_header_branch
        %281 = sbr.rel (%p279) target = $region178
      $region175: #{time_embedding_forward.1} parent=170 // loop_body
        %v285 = vld [vmem:[%s283] sm:%s276]
        %286 = vst [vmem:[%s284] sm:%s276] %v285
      $region176: #{time_embedding_forward.1} parent=170 // loop_footer
        %s282 = sadd.s32 1, %s278
      $region177: #{time_embedding_forward.1} parent=170 // loop_footer_branch
        %277 = sbr.rel target = $region173
      $region178: #{time_embedding_forward.1} parent=170 // loop_exit
        _
    $region171: #{time_embedding_forward.1} parent=1 // pred_fallthru
      _
    // Predicated region
    $region190: #{time_embedding_forward.1} parent=1 // pred_check
      _
    $region191: #{time_embedding_forward.1} parent=1 // pred_check_branch
      %310 = sbr.rel (0) target = $region193
    $region192: #{time_embedding_forward.1} parent=1 // pred_region
      %311 = vsyncadd %s267, 16
    $region193: #{time_embedding_forward.1} parent=1 // pred_fallthru
      _
    %s312 = sld [smem:[#allocation4 + $0x6]]
    %s313 = scalar_lea.vmem %s1, %s312
    %s314 = scalar_lea.vmem [#allocation2], 6
    %s315 = scalar_lea.sflag [#allocation3], 6
    %p317 = scmp.lt.u32.totalorder 1, 8
    %p318 = pneg %p317
    // Predicated region
    $region194: #{time_embedding_forward.1} parent=1 // pred_check
      _
    $region195: #{time_embedding_forward.1} parent=1 // pred_check_branch
      %320 = sbr.rel (%p317) target = $region197
    $region196: #{time_embedding_forward.1} parent=1 // pred_region
      %s335 = sand.u32 1, 7
      %p336 = scmp.eq.s32.totalorder %s335, 0
      %p337 = pneg %p336
      // Predicated region
      $region209: #{time_embedding_forward.1} parent=196 // pred_check
        _
      $region210: #{time_embedding_forward.1} parent=196 // pred_check_branch
        %339 = sbr.rel (%p336) target = $region212
      $region211: #{time_embedding_forward.1} parent=196 // pred_region
        %s340 = sand.u32 1, 7
        %s341 = ssub.s32 1, %s340
        %s342 = scalar_lea.vmem %s313, %s341
        %s343 = ssub.s32 1, %s340
        %s344 = scalar_lea.vmem %s314, %s343 [#allocation2]
        %s345 = sshllo.u32 0, %s340
        loop: start=0, step=1, limit=1
        $region213: #{time_embedding_forward.1} parent=211 // loop_pre_header
          _
        $region214: #{time_embedding_forward.1} parent=211 // loop_header
          %s347 = sphi 0, %s351
          %p348 = scmp.ge.s32.totalorder %s347, 1
          %s352 = sphi %s342, %s342
          %s353 = sphi %s344, %s344
        $region215: #{time_embedding_forward.1} parent=211 // loop_header_branch
          %350 = sbr.rel (%p348) target = $region219
        $region216: #{time_embedding_forward.1} parent=211 // loop_body
          %v354 = vld [vmem:[%s352] sm:%s345]
          %355 = vst [vmem:[%s353] sm:%s345] %v354
        $region217: #{time_embedding_forward.1} parent=211 // loop_footer
          %s351 = sadd.s32 1, %s347
        $region218: #{time_embedding_forward.1} parent=211 // loop_footer_branch
          %346 = sbr.rel target = $region214
        $region219: #{time_embedding_forward.1} parent=211 // loop_exit
          _
      $region212: #{time_embedding_forward.1} parent=196 // pred_fallthru
        _
    $region197: #{time_embedding_forward.1} parent=1 // pred_fallthru
      _
    // Predicated region
    $region198: #{time_embedding_forward.1} parent=1 // pred_check
      %p321 = pneg %p317
    $region199: #{time_embedding_forward.1} parent=1 // pred_check_branch
      %323 = sbr.rel (%p321) target = $region201
    $region200: #{time_embedding_forward.1} parent=1 // pred_region
      %s324 = sshllo.u32 0, 1
      loop: start=0, step=1, limit=1
      $region202: #{time_embedding_forward.1} parent=200 // loop_pre_header
        _
      $region203: #{time_embedding_forward.1} parent=200 // loop_header
        %s326 = sphi 0, %s330
        %p327 = scmp.ge.s32.totalorder %s326, 1
        %s331 = sphi %s313, %s313
        %s332 = sphi %s314, %s314
      $region204: #{time_embedding_forward.1} parent=200 // loop_header_branch
        %329 = sbr.rel (%p327) target = $region208
      $region205: #{time_embedding_forward.1} parent=200 // loop_body
        %v333 = vld [vmem:[%s331] sm:%s324]
        %334 = vst [vmem:[%s332] sm:%s324] %v333
      $region206: #{time_embedding_forward.1} parent=200 // loop_footer
        %s330 = sadd.s32 1, %s326
      $region207: #{time_embedding_forward.1} parent=200 // loop_footer_branch
        %325 = sbr.rel target = $region203
      $region208: #{time_embedding_forward.1} parent=200 // loop_exit
        _
    $region201: #{time_embedding_forward.1} parent=1 // pred_fallthru
      _
    // Predicated region
    $region220: #{time_embedding_forward.1} parent=1 // pred_check
      _
    $region221: #{time_embedding_forward.1} parent=1 // pred_check_branch
      %358 = sbr.rel (0) target = $region223
    $region222: #{time_embedding_forward.1} parent=1 // pred_region
      %359 = vsyncadd %s315, 16
    $region223: #{time_embedding_forward.1} parent=1 // pred_fallthru
      _
    %s360 = sld [smem:[#allocation4 + $0x7]]
    %s361 = scalar_lea.vmem %s1, %s360
    %s362 = scalar_lea.vmem [#allocation2], 7
    %s363 = scalar_lea.sflag [#allocation3], 7
    %p365 = scmp.lt.u32.totalorder 1, 8
    %p366 = pneg %p365
    // Predicated region
    $region224: #{time_embedding_forward.1} parent=1 // pred_check
      _
    $region225: #{time_embedding_forward.1} parent=1 // pred_check_branch
      %368 = sbr.rel (%p365) target = $region227
    $region226: #{time_embedding_forward.1} parent=1 // pred_region
      %s383 = sand.u32 1, 7
      %p384 = scmp.eq.s32.totalorder %s383, 0
      %p385 = pneg %p384
      // Predicated region
      $region239: #{time_embedding_forward.1} parent=226 // pred_check
        _
      $region240: #{time_embedding_forward.1} parent=226 // pred_check_branch
        %387 = sbr.rel (%p384) target = $region242
      $region241: #{time_embedding_forward.1} parent=226 // pred_region
        %s388 = sand.u32 1, 7
        %s389 = ssub.s32 1, %s388
        %s390 = scalar_lea.vmem %s361, %s389
        %s391 = ssub.s32 1, %s388
        %s392 = scalar_lea.vmem %s362, %s391 [#allocation2]
        %s393 = sshllo.u32 0, %s388
        loop: start=0, step=1, limit=1
        $region243: #{time_embedding_forward.1} parent=241 // loop_pre_header
          _
        $region244: #{time_embedding_forward.1} parent=241 // loop_header
          %s395 = sphi 0, %s399
          %p396 = scmp.ge.s32.totalorder %s395, 1
          %s400 = sphi %s390, %s390
          %s401 = sphi %s392, %s392
        $region245: #{time_embedding_forward.1} parent=241 // loop_header_branch
          %398 = sbr.rel (%p396) target = $region249
        $region246: #{time_embedding_forward.1} parent=241 // loop_body
          %v402 = vld [vmem:[%s400] sm:%s393]
          %403 = vst [vmem:[%s401] sm:%s393] %v402
        $region247: #{time_embedding_forward.1} parent=241 // loop_footer
          %s399 = sadd.s32 1, %s395
        $region248: #{time_embedding_forward.1} parent=241 // loop_footer_branch
          %394 = sbr.rel target = $region244
        $region249: #{time_embedding_forward.1} parent=241 // loop_exit
          _
      $region242: #{time_embedding_forward.1} parent=226 // pred_fallthru
        _
    $region227: #{time_embedding_forward.1} parent=1 // pred_fallthru
      _
    // Predicated region
    $region228: #{time_embedding_forward.1} parent=1 // pred_check
      %p369 = pneg %p365
    $region229: #{time_embedding_forward.1} parent=1 // pred_check_branch
      %371 = sbr.rel (%p369) target = $region231
    $region230: #{time_embedding_forward.1} parent=1 // pred_region
      %s372 = sshllo.u32 0, 1
      loop: start=0, step=1, limit=1
      $region232: #{time_embedding_forward.1} parent=230 // loop_pre_header
        _
      $region233: #{time_embedding_forward.1} parent=230 // loop_header
        %s374 = sphi 0, %s378
        %p375 = scmp.ge.s32.totalorder %s374, 1
        %s379 = sphi %s361, %s361
        %s380 = sphi %s362, %s362
      $region234: #{time_embedding_forward.1} parent=230 // loop_header_branch
        %377 = sbr.rel (%p375) target = $region238
      $region235: #{time_embedding_forward.1} parent=230 // loop_body
        %v381 = vld [vmem:[%s379] sm:%s372]
        %382 = vst [vmem:[%s380] sm:%s372] %v381
      $region236: #{time_embedding_forward.1} parent=230 // loop_footer
        %s378 = sadd.s32 1, %s374
      $region237: #{time_embedding_forward.1} parent=230 // loop_footer_branch
        %373 = sbr.rel target = $region233
      $region238: #{time_embedding_forward.1} parent=230 // loop_exit
        _
    $region231: #{time_embedding_forward.1} parent=1 // pred_fallthru
      _
    // Predicated region
    $region250: #{time_embedding_forward.1} parent=1 // pred_check
      _
    $region251: #{time_embedding_forward.1} parent=1 // pred_check_branch
      %406 = sbr.rel (0) target = $region253
    $region252: #{time_embedding_forward.1} parent=1 // pred_region
      %407 = vsyncadd %s363, 16
    $region253: #{time_embedding_forward.1} parent=1 // pred_fallthru
      _
    %409 = dma.done [#allocation3], 16
    %411 = dma.done %s75, 16
    %413 = dma.done %s123, 16
    %415 = dma.done %s171, 16
    %417 = dma.done %s219, 16
    %419 = dma.done %s267, 16
    %421 = dma.done %s315, 16
    %423 = dma.done %s363, 16
    %v424 = vld [vmem:[%s2] sm:$0xff]
    %v425 = vld [vmem:[%s2 + $0x8] sm:$0xff]
    %v426 = vld [vmem:[%s2 + $0x10] sm:$0xff]
    %v427 = vld [vmem:[%s2 + $0x18] sm:$0xff]
    %v428 = vld [vmem:[%s2 + $0x20] sm:$0x1]
    %v429 = vld [vmem:[%s2 + $0x28] sm:$0xff]
    %v430 = vld [vmem:[%s2 + $0x30] sm:$0xff]
    %v431 = vld [vmem:[%s2 + $0x38] sm:$0xff]
    %v432 = vld [vmem:[%s2 + $0x40] sm:$0xff]
    %v433 = vld [vmem:[%s2 + $0x48] sm:$0xff]
    %v434 = vld [vmem:[%s2 + $0x50] sm:$0xff]
    %v435 = vld [vmem:[%s2 + $0x58] sm:$0xff]
    %v436 = vld [vmem:[%s2 + $0x60] sm:$0xff]
    %v437 = vld [vmem:[%s2 + $0x68] sm:$0x1]
    %v438 = vld [vmem:[#allocation2] sm:$0xff]
    %v439 = vlaneseq
    %v440 = vshrl.u32 %v439, 7
    %v441 = vsub.s32 0, %v440
    %v442 = vrot.slane %v428, %v441
    %vm443 = vcmask 261120
    %v445 = vsel %vm443, %v438, 0
    %447 = vmatprep.subr.mxu0 0.0
    %448 = vmatpush1.msra.mxu0 %v424
    %449 = vmatprep.subr.mxu0 0.0
    %450 = vmatpush1.msra.mxu0 %v425
    %451 = vmatprep.subr.mxu0 0.0
    %452 = vmatpush1.msra.mxu0 %v426
    %453 = vmatprep.subr.mxu0 0.0
    %454 = vmatpush1.msra.mxu0 %v427
    %455 = vmatprep.subr.mxu0 0.0
    %456 = vmatpush1.msra.mxu0 0.0
    %457 = vmatprep.subr.mxu0 0.0
    %458 = vmatpush1.msra.mxu0 0.0
    %459 = vmatprep.subr.mxu0 0.0
    %460 = vmatpush1.msra.mxu0 0.0
    %461 = vmatprep.subr.mxu0 0.0
    %462 = vmatpush1.msra.mxu0 0.0
    %463 = vmatprep.subr.mxu0 0.0
    %464 = vmatpush1.msra.mxu0 0.0
    %465 = vmatprep.subr.mxu0 0.0
    %466 = vmatpush1.msra.mxu0 0.0
    %467 = vmatprep.subr.mxu0 0.0
    %468 = vmatpush1.msra.mxu0 0.0
    %469 = vmatprep.subr.mxu0 0.0
    %470 = vmatpush1.msra.mxu0 0.0
    %471 = vmatprep.subr.mxu0 0.0
    %472 = vmatpush1.msra.mxu0 0.0
    %473 = vmatprep.subr.mxu0 0.0
    %474 = vmatpush1.msra.mxu0 0.0
    %475 = vmatprep.subr.mxu0 0.0
    %476 = vmatpush1.msra.mxu0 0.0
    %477 = vmatprep.subr.mxu0 0.0
    %478 = vmatpush1.msra.mxu0 0.0
    %479 = vmatprep.subr.mxu0 0.0
    %480 = vmatpush1.msra.mxu0 0.0
    %481 = vmatprep.subr.mxu0 0.0
    %482 = vmatpush1.msra.mxu0 0.0
    %483 = vmatprep.subr.mxu0 0.0
    %484 = vmatpush1.msra.mxu0 0.0
    %485 = vmatprep.subr.mxu0 0.0
    %486 = vmatpush1.msra.mxu0 0.0
    %487 = vmatprep.subr.mxu0 0.0
    %488 = vmatpush1.msra.mxu0 0.0
    %489 = vmatprep.subr.mxu0 0.0
    %490 = vmatpush1.msra.mxu0 0.0
    %491 = vmatprep.subr.mxu0 0.0
    %492 = vmatpush1.msra.mxu0 0.0
    %493 = vmatprep.subr.mxu0 0.0
    %494 = vmatpush1.msra.mxu0 0.0
    %495 = vmatprep.subr.mxu0 0.0
    %496 = vmatpush1.msra.mxu0 0.0
    %497 = vmatprep.subr.mxu0 0.0
    %498 = vmatpush1.msra.mxu0 0.0
    %499 = vmatprep.subr.mxu0 0.0
    %500 = vmatpush1.msra.mxu0 0.0
    %501 = vmatprep.subr.mxu0 0.0
    %502 = vmatpush1.msra.mxu0 0.0
    %503 = vmatprep.subr.mxu0 0.0
    %504 = vmatpush1.msra.mxu0 0.0
    %505 = vmatprep.subr.mxu0 0.0
    %506 = vmatpush1.msra.mxu0 0.0
    %507 = vmatprep.subr.mxu0 0.0
    %508 = vmatpush1.msra.mxu0 0.0
    %509 = vmatprep.subr.mxu0 0.0
    %510 = vmatpush1.msra.mxu0 0.0
    %511 = vmatprep.mubr.f32.mxu0 0.0
    %512 = vmatmul.mubr.f32.gmra.mrb[0].mxu0 %v445
    %v513 = vpop.f32.mrb[0].mxu0
    %v514 = vadd.f32 %v442, %v513
    %v515 = vpop.f32.mrb[0].mxu0
    %516 = vdwg.mxu0
    %v517 = vxor.u32 %v514, 2147483648
    %v518 = vmul.f32 %v517, 1.442695
    %v519 = vpow.pop %v518
    %v520 = vadd.f32 %v519, 1.0
    %v521 = vrcp.pop %v520
    %v522 = vmul.f32 1.0, %v521
    %v523 = vmul.f32 %v514, %v522
    %v524 = vlaneseq
    %v525 = vshrl.u32 %v524, 7
    %v526 = vsub.s32 0, %v525
    %v527 = vrot.slane %v437, %v526
    %vm528 = vcmask 523264
    %v530 = vsel %vm528, %v523, 0
    %532 = vmatprep.subr.mxu0 0.0
    %533 = vmatpush1.msra.mxu0 %v429
    %534 = vmatprep.subr.mxu0 0.0
    %535 = vmatpush1.msra.mxu0 %v430
    %536 = vmatprep.subr.mxu0 0.0
    %537 = vmatpush1.msra.mxu0 %v431
    %538 = vmatprep.subr.mxu0 0.0
    %539 = vmatpush1.msra.mxu0 %v432
    %540 = vmatprep.subr.mxu0 0.0
    %541 = vmatpush1.msra.mxu0 %v433
    %542 = vmatprep.subr.mxu0 0.0
    %543 = vmatpush1.msra.mxu0 %v434
    %544 = vmatprep.subr.mxu0 0.0
    %545 = vmatpush1.msra.mxu0 %v435
    %546 = vmatprep.subr.mxu0 0.0
    %547 = vmatpush1.msra.mxu0 %v436
    %548 = vmatprep.subr.mxu0 0.0
    %549 = vmatpush1.msra.mxu0 0.0
    %550 = vmatprep.subr.mxu0 0.0
    %551 = vmatpush1.msra.mxu0 0.0
    %552 = vmatprep.subr.mxu0 0.0
    %553 = vmatpush1.msra.mxu0 0.0
    %554 = vmatprep.subr.mxu0 0.0
    %555 = vmatpush1.msra.mxu0 0.0
    %556 = vmatprep.subr.mxu0 0.0
    %557 = vmatpush1.msra.mxu0 0.0
    %558 = vmatprep.subr.mxu0 0.0
    %559 = vmatpush1.msra.mxu0 0.0
    %560 = vmatprep.subr.mxu0 0.0
    %561 = vmatpush1.msra.mxu0 0.0
    %562 = vmatprep.subr.mxu0 0.0
    %563 = vmatpush1.msra.mxu0 0.0
    %564 = vmatprep.subr.mxu0 0.0
    %565 = vmatpush1.msra.mxu0 0.0
    %566 = vmatprep.subr.mxu0 0.0
    %567 = vmatpush1.msra.mxu0 0.0
    %568 = vmatprep.subr.mxu0 0.0
    %569 = vmatpush1.msra.mxu0 0.0
    %570 = vmatprep.subr.mxu0 0.0
    %571 = vmatpush1.msra.mxu0 0.0
    %572 = vmatprep.subr.mxu0 0.0
    %573 = vmatpush1.msra.mxu0 0.0
    %574 = vmatprep.subr.mxu0 0.0
    %575 = vmatpush1.msra.mxu0 0.0
    %576 = vmatprep.subr.mxu0 0.0
    %577 = vmatpush1.msra.mxu0 0.0
    %578 = vmatprep.subr.mxu0 0.0
    %579 = vmatpush1.msra.mxu0 0.0
    %580 = vmatprep.subr.mxu0 0.0
    %581 = vmatpush1.msra.mxu0 0.0
    %582 = vmatprep.subr.mxu0 0.0
    %583 = vmatpush1.msra.mxu0 0.0
    %584 = vmatprep.subr.mxu0 0.0
    %585 = vmatpush1.msra.mxu0 0.0
    %586 = vmatprep.subr.mxu0 0.0
    %587 = vmatpush1.msra.mxu0 0.0
    %588 = vmatprep.subr.mxu0 0.0
    %589 = vmatpush1.msra.mxu0 0.0
    %590 = vmatprep.subr.mxu0 0.0
    %591 = vmatpush1.msra.mxu0 0.0
    %592 = vmatprep.subr.mxu0 0.0
    %593 = vmatpush1.msra.mxu0 0.0
    %594 = vmatprep.subr.mxu0 0.0
    %595 = vmatpush1.msra.mxu0 0.0
    %596 = vmatprep.mubr.f32.mxu0 0.0
    %597 = vmatmul.mubr.f32.gmra.mrb[0].mxu0 %v530
    %v598 = vpop.f32.mrb[0].mxu0
    %v599 = vadd.f32 %v527, %v598
    %v600 = vpop.f32.mrb[0].mxu0
    %601 = vdwg.mxu0
    %602 = vst.msk [vmem:[#allocation7] sm:$0xff] %vm528, %v599
    // Predicated region
    $region254: #{time_embedding_forward.1} parent=1 // pred_check
      _
    $region255: #{time_embedding_forward.1} parent=1 // pred_check_branch
      %604 = sbr.rel (0) target = $region257
    $region256: #{time_embedding_forward.1} parent=1 // pred_region
      %s606 = ssub.s32 128, 128
      %607 = vsyncadd [#allocation5], %s606
      %s609 = sshll.u32 [#allocation7], 4
      %s610 = int_to_ptr.vmem [resolvable:$true] %s609
      %612 = dma.vmem_to_hbm [thread:$0]  %s610, 128, %s3, [#allocation5]
    $region257: #{time_embedding_forward.1} parent=1 // pred_fallthru
      _
    // Predicated region
    $region258: #{time_embedding_forward.1} parent=1 // pred_check
      _
    $region259: #{time_embedding_forward.1} parent=1 // pred_check_branch
      %614 = sbr.rel (0) target = $region261
    $region260: #{time_embedding_forward.1} parent=1 // pred_region
      %615 = dma.done [#allocation5], 128
    $region261: #{time_embedding_forward.1} parent=1 // pred_fallthru
      _
    %616 = vsyncpa [#allocation5], 1
    %617 = vsyncpa [#allocation6], 1
  %618 = vsyncmov [#allocation3]
  %s619 = vpop.sfrf %618
  %p620 = scmp.eq.s32.totalorder %s619, 0
  %p621 = pneg %p620
  %623 = shalt.err (%p621)
  %s624 = scalar_lea.sflag [#allocation3], 1
  %625 = vsyncmov %s624
  %s626 = vpop.sfrf %625
  %p627 = scmp.eq.s32.totalorder %s626, 0
  %p628 = pneg %p627
  %630 = shalt.err (%p628)
  %s631 = scalar_lea.sflag [#allocation3], 2
  %632 = vsyncmov %s631
  %s633 = vpop.sfrf %632
  %p634 = scmp.eq.s32.totalorder %s633, 0
  %p635 = pneg %p634
  %637 = shalt.err (%p635)
  %s638 = scalar_lea.sflag [#allocation3], 3
  %639 = vsyncmov %s638
  %s640 = vpop.sfrf %639
  %p641 = scmp.eq.s32.totalorder %s640, 0
  %p642 = pneg %p641
  %644 = shalt.err (%p642)
  %s645 = scalar_lea.sflag [#allocation3], 4
  %646 = vsyncmov %s645
  %s647 = vpop.sfrf %646
  %p648 = scmp.eq.s32.totalorder %s647, 0
  %p649 = pneg %p648
  %651 = shalt.err (%p649)
  %s652 = scalar_lea.sflag [#allocation3], 5
  %653 = vsyncmov %s652
  %s654 = vpop.sfrf %653
  %p655 = scmp.eq.s32.totalorder %s654, 0
  %p656 = pneg %p655
  %658 = shalt.err (%p656)
  %s659 = scalar_lea.sflag [#allocation3], 6
  %660 = vsyncmov %s659
  %s661 = vpop.sfrf %660
  %p662 = scmp.eq.s32.totalorder %s661, 0
  %p663 = pneg %p662
  %665 = shalt.err (%p663)
  %s666 = scalar_lea.sflag [#allocation3], 7
  %667 = vsyncmov %s666
  %s668 = vpop.sfrf %667
  %p669 = scmp.eq.s32.totalorder %s668, 0
  %p670 = pneg %p669
  %672 = shalt.err (%p670)

</llo_original>
